<compile_context>
chip_gen: v5e
topology: v5e:2x2
jax: 0.10.0
libtpu: 0.0.40
codegen_flags: <defaults>
</compile_context>

<pallas_src>
import functools

import jax
import jax.numpy as jnp
from jax.experimental import pallas as pl
from jax.experimental.pallas import tpu as pltpu


def _focal_kernel(x_ref, t_ref, o_ref, acc_ref, *, gamma, hw, block_hw):
    j = pl.program_id(1)          # spatial block index (reduction axis, last)

    # Reset the per-batch lane accumulator at the start of every batch row.
    @pl.when(j == 0)
    def _():
        acc_ref[...] = jnp.zeros_like(acc_ref)

    x = x_ref[...].astype(jnp.float32)       # (C, block_hw) logits, lane-dense
    t = t_ref[...].astype(jnp.int32)         # (1, block_hw) target ids (widened)

    # Numerically stable log-softmax pieces over the class (sublane) axis.
    m = jnp.max(x, axis=0, keepdims=True)            # (1, block_hw)
    e = jnp.exp(x - m)                               # (C, block_hw), in [0, 1]

    # One-hot "class_mask" via iota == target (replaces scatter_).
    ids = jax.lax.broadcasted_iota(jnp.int32, x.shape, 0)
    hit = ids == t                                   # (C, block_hw) bool

    x_t = jnp.sum(jnp.where(hit, x, 0.0), axis=0, keepdims=True)
    e_t = jnp.sum(jnp.where(hit, e, 0.0), axis=0, keepdims=True)
    s_other = jnp.sum(jnp.where(hit, 0.0, e), axis=0, keepdims=True)
    s = e_t + s_other                                # softmax denom, >= 1

    log_p = (x_t - m) - jnp.log(s)                   # log p of the target class
    # 1 - p_t as the *other* classes' probability mass: exact, no cancellation
    # when p_t -> 1, and no additional EUP transcendental.
    one_minus = s_other / s

    # (1 - p)^gamma: integer-gamma fast path (default gamma=2.0) avoids
    # jnp.power's exp(g*log(.)) transcendentals.
    g_int = int(gamma)
    if float(gamma) == float(g_int) and 0 <= g_int <= 8:
        if g_int == 0:
            mod = jnp.ones_like(one_minus)
        else:
            mod = one_minus
            for _ in range(g_int - 1):
                mod = mod * one_minus
    else:
        mod = jnp.power(one_minus, jnp.float32(gamma))

    loss = -mod * log_p                              # (1, block_hw)

    # Mask tail lanes when h*w is not a multiple of block_hw.
    if hw % block_hw != 0:
        lane = jax.lax.broadcasted_iota(jnp.int32, loss.shape, 1)
        loss = jnp.where(j * block_hw + lane < hw, loss, 0.0)

    # Per-lane partial sums; no cross-lane reduction on the per-step path.
    acc_ref[...] += loss

    # Per-batch epilogue: one cross-lane reduction, one dense (8,128) store.
    @pl.when(j == pl.num_programs(1) - 1)
    def _():
        total = jnp.sum(acc_ref[...])
        row = jax.lax.broadcasted_iota(jnp.int32, (8, 128), 0)
        lane = jax.lax.broadcasted_iota(jnp.int32, (8, 128), 1)
        o_ref[...] = jnp.where((row == 0) & (lane == 0), total, 0.0)


def _vmem_capacity_bytes():
    try:
        info = pltpu.get_tpu_info()
        cap = getattr(info, "vmem_capacity_bytes", None)
        if cap:
            return int(cap)
    except Exception:
        pass
    return 64 * 1024 * 1024   # conservative: v7x per-TensorCore VMEM


def focal_loss(x, target, *, gamma=2.0, aver=True, block_hw=None):
    """x: (n, c, h, w) float logits (NCHW); target: (n, h, w) int class ids."""
    n, c, h, w = x.shape
    hw = h * w
    total_n = n * hw

    # Free views: no materialized NCHW->NHWC transpose.
    xf = x.reshape(n, c, hw)

    # Narrow targets in HBM (pure streaming traffic); widen inside the kernel.
    if c <= 127:
        t_dtype, t_bytes = jnp.int8, 1
    elif c <= 32767:
        t_dtype, t_bytes = jnp.int16, 2
    else:
        t_dtype, t_bytes = jnp.int32, 4
    tf = target.reshape(n, 1, hw).astype(t_dtype)

    vmem_cap = _vmem_capacity_bytes()
    c_pad = ((c + 7) // 8) * 8
    # Padded VMEM bytes per spatial lane: double-buffered logits (C rounded to
    # 8 sublanes) + double-buffered 1-row target block (pads to a native tile,
    # ~32 B/lane regardless of dtype) + the 1-row f32 accumulator (~32 B/lane).
    lane_vmem = 2 * (c_pad * 4) + 2 * 32 + 32
    lane_hbm = 4 * c + t_bytes

    if block_hw is None:
        if hw <= 512:
            block_hw = hw
        else:
            hbm_target = 4 * 1024 * 1024            # ~4 MiB HBM traffic / step
            vmem_target = int(vmem_cap * 0.30)      # headroom for temporaries
            bhw = min(hbm_target // lane_hbm, vmem_target // lane_vmem)
            bhw = max(512, (bhw // 128) * 128)
            block_hw = hw if bhw >= hw else bhw
    else:
        block_hw = hw if block_hw >= hw else max(128, (block_hw // 128) * 128)

    num_hw_blocks = pl.cdiv(hw, block_hw)
    grid = (n, num_hw_blocks)

    # Explicit scoped-VMEM limit: padded per-step footprint + ~2x headroom for
    # elementwise temporaries over the (c_pad, block_hw) tile.
    footprint = lane_vmem * block_hw + 2 * 8 * 128 * 4
    vmem_limit = int(footprint * 2.0) + (4 << 20)
    vmem_limit = max(vmem_limit, 16 << 20)
    vmem_limit = min(vmem_limit, int(vmem_cap * 0.8))

    kernel = functools.partial(_focal_kernel, gamma=float(gamma), hw=hw,
                               block_hw=block_hw)

    cost = pl.CostEstimate(
        flops=int(n * hw * (8 * c + 16)),
        transcendentals=int(n * hw * (c + 2)),
        bytes_accessed=int(n * hw * lane_hbm + n * 8 * 128 * 4),
    )

    out = pl.pallas_call(
        kernel,
        out_shape=jax.ShapeDtypeStruct((n, 8, 128), jnp.float32),
        grid_spec=pltpu.PrefetchScalarGridSpec(
            num_scalar_prefetch=0,
            grid=grid,
            in_specs=[
                # (None, c, block_hw): batch dim squeezed -> kernel sees a
                # lane-dense (c, block_hw) tile.
                pl.BlockSpec((None, c, block_hw), lambda i, j: (i, 0, j)),
                pl.BlockSpec((None, 1, block_hw), lambda i, j: (i, 0, j)),
            ],
            # Per-batch partial sums (lane-dense 8x128 tile per batch row) so
            # the batch axis carries no state and can be split across cores.
            out_specs=pl.BlockSpec((None, 8, 128), lambda i, j: (i, 0, 0)),
            scratch_shapes=[pltpu.VMEM((1, block_hw), jnp.float32)],
        ),
        compiler_params=pltpu.CompilerParams(
            dimension_semantics=("parallel", "arbitrary"),
            vmem_limit_bytes=vmem_limit,
        ),
        cost_estimate=cost,
    )(xf, tf)

    loss = jnp.sum(out)
    if aver:
        loss = loss / jnp.float32(total_n)
    return loss


def _focal_loss_ref(x, target, gamma=2.0, aver=True):
    n, c, h, w = x.shape
    xf = jnp.transpose(x, (0, 2, 3, 1)).reshape(-1, c).astype(jnp.float32)
    tf = target.reshape(-1)
    logp_all = jax.nn.log_softmax(xf, axis=1)
    log_p = jnp.take_along_axis(logp_all, tf[:, None], axis=1)
    probs = jnp.exp(log_p)
    loss = -jnp.power(1.0 - probs, gamma) * log_p
    return jnp.mean(loss) if aver else jnp.sum(loss)


if __name__ == "__main__":
    key = jax.random.PRNGKey(0)
    k1, k2, k3, k4 = jax.random.split(key, 4)

    # main test: matches the module's typical NCHW input
    n, c, h, w = 2, 4, 16, 16
    gamma = 2.0
    x = jax.random.normal(k1, (n, c, h, w), dtype=jnp.float32)
    target = jax.random.randint(k2, (n, h, w), 0, c, dtype=jnp.int32)

    loss = focal_loss(x, target, gamma=gamma, aver=True)
    loss = jax.block_until_ready(loss)
    ref = _focal_loss_ref(x, target, gamma=gamma, aver=True)
    assert jnp.allclose(loss, ref, rtol=1e-5, atol=1e-5), (loss, ref)

    # second test: non-multiple-of-128 spatial size + forced small block to
    # exercise tail-lane masking, sum reduction, non-integer gamma path
    n2, c2, h2, w2 = 1, 5, 13, 11
    x2 = jax.random.normal(k3, (n2, c2, h2, w2), dtype=jnp.float32)
    t2 = jax.random.randint(k4, (n2, h2, w2), 0, c2, dtype=jnp.int32)
    loss2 = focal_loss(x2, t2, gamma=1.5, aver=False, block_hw=128)
    loss2 = jax.block_until_ready(loss2)
    ref2 = _focal_loss_ref(x2, t2, gamma=1.5, aver=False)
    assert jnp.allclose(loss2, ref2, rtol=1e-5, atol=1e-5), (loss2, ref2)

    print("KERNEL_OK")
</pallas_src>

<mosaic_0001>
module attributes {stable_mosaic.version = 11 : i64} {
  func.func @_focal_kernel(%arg0: i32, %arg1: i32, %arg2: memref<1x4x256xf32, #tpu.memory_space<vmem>>, %arg3: memref<1x1x256xi8, #tpu.memory_space<vmem>>, %arg4: memref<1x8x128xf32, #tpu.memory_space<vmem>>, %arg5: memref<1x256xf32, #tpu.memory_space<vmem>>) attributes {dimension_semantics = [#tpu.dimension_semantics<parallel>, #tpu.dimension_semantics<arbitrary>], iteration_bounds = array<i64: 2, 1>, scalar_prefetch = 0 : i64, scratch_operands = 1 : i64, tpu.core_type = #tpu.core_type<tc>, window_params = [{transform_indices = @transform_0, window_bounds = array<i64: 1, 4, 256>}, {transform_indices = @transform_1, window_bounds = array<i64: 1, 1, 256>}, {transform_indices = @transform_2, window_bounds = array<i64: 1, 8, 128>}]} {
    %c0_i32 = arith.constant 0 : i32
    %0 = arith.cmpi eq, %arg1, %c0_i32 : i32
    %1 = arith.extui %0 : i1 to i32
    %c0_i32_0 = arith.constant 0 : i32
    %2 = arith.cmpi ne, %1, %c0_i32_0 : i32
    scf.if %2 {
      %cst_19 = arith.constant 0.000000e+00 : f32
      %43 = vector.broadcast %cst_19 : f32 to vector<1x256xf32>
      %c0_20 = arith.constant 0 : index
      %c0_21 = arith.constant 0 : index
      %44 = vector.load %arg5[%c0_20, %c0_21] : memref<1x256xf32, #tpu.memory_space<vmem>>, vector<1x256xf32>
      tpu.vector_store %arg5[%c0_20, %c0_21], %43 {strides = array<i32>} : memref<1x256xf32, #tpu.memory_space<vmem>>, vector<1x256xf32>,
    } else {
    }
    %c0 = arith.constant 0 : index
    %c0_1 = arith.constant 0 : index
    %c0_2 = arith.constant 0 : index
    %3 = vector.load %arg2[%c0, %c0_1, %c0_2] : memref<1x4x256xf32, #tpu.memory_space<vmem>>, vector<1x4x256xf32>
    %4 = vector.shape_cast %3 : vector<1x4x256xf32> to vector<4x256xf32>
    %c0_3 = arith.constant 0 : index
    %c0_4 = arith.constant 0 : index
    %c0_5 = arith.constant 0 : index
    %5 = vector.load %arg3[%c0_3, %c0_4, %c0_5] : memref<1x1x256xi8, #tpu.memory_space<vmem>>, vector<1x1x256xi8>
    %6 = vector.shape_cast %5 : vector<1x1x256xi8> to vector<1x256xi8>
    %7 = arith.extsi %6 : vector<1x256xi8> to vector<1x256xi32>
    %cst = arith.constant dense<0xFF800000> : vector<256xf32>
    %8 = vector.multi_reduction <maximumf>, %4, %cst [0] : vector<4x256xf32> to vector<256xf32>
    %9 = vector.shape_cast %8 : vector<256xf32> to vector<1x256xf32>
    %10 = vector.broadcast %9 : vector<1x256xf32> to vector<4x256xf32>
    %11 = arith.subf %4, %10 : vector<4x256xf32>
    %12 = math.exp %11 : vector<4x256xf32>
    %13 = tpu.iota {dimensions = array<i32: 0>} : vector<4x256xi32>
    %14 = vector.broadcast %7 : vector<1x256xi32> to vector<4x256xi32>
    %15 = arith.cmpi eq, %13, %14 : vector<4x256xi32>
    %cst_6 = arith.constant 0.000000e+00 : f32
    %16 = vector.broadcast %cst_6 : f32 to vector<4x256xf32>
    %17 = arith.select %15, %4, %16 : vector<4x256xi1>, vector<4x256xf32>
    %cst_7 = arith.constant dense<0.000000e+00> : vector<256xf32>
    %18 = vector.multi_reduction <add>, %17, %cst_7 [0] : vector<4x256xf32> to vector<256xf32>
    %19 = vector.shape_cast %18 : vector<256xf32> to vector<1x256xf32>
    %cst_8 = arith.constant 0.000000e+00 : f32
    %20 = vector.broadcast %cst_8 : f32 to vector<4x256xf32>
    %21 = arith.select %15, %12, %20 : vector<4x256xi1>, vector<4x256xf32>
    %cst_9 = arith.constant dense<0.000000e+00> : vector<256xf32>
    %22 = vector.multi_reduction <add>, %21, %cst_9 [0] : vector<4x256xf32> to vector<256xf32>
    %23 = vector.shape_cast %22 : vector<256xf32> to vector<1x256xf32>
    %cst_10 = arith.constant 0.000000e+00 : f32
    %24 = vector.broadcast %cst_10 : f32 to vector<4x256xf32>
    %25 = arith.select %15, %24, %12 : vector<4x256xi1>, vector<4x256xf32>
    %cst_11 = arith.constant dense<0.000000e+00> : vector<256xf32>
    %26 = vector.multi_reduction <add>, %25, %cst_11 [0] : vector<4x256xf32> to vector<256xf32>
    %27 = vector.shape_cast %26 : vector<256xf32> to vector<1x256xf32>
    %28 = arith.addf %23, %27 : vector<1x256xf32>
    %29 = arith.subf %19, %9 : vector<1x256xf32>
    %30 = math.log %28 : vector<1x256xf32>
    %31 = arith.subf %29, %30 : vector<1x256xf32>
    %32 = arith.divf %27, %28 : vector<1x256xf32>
    %33 = arith.mulf %32, %32 : vector<1x256xf32>
    %cst_12 = arith.constant 0.000000e+00 : f32
    %34 = vector.broadcast %cst_12 : f32 to vector<1x256xf32>
    %35 = arith.subf %34, %33 : vector<1x256xf32>
    %36 = arith.mulf %35, %31 : vector<1x256xf32>
    %c0_13 = arith.constant 0 : index
    %c0_14 = arith.constant 0 : index
    %37 = vector.load %arg5[%c0_13, %c0_14] : memref<1x256xf32, #tpu.memory_space<vmem>>, vector<1x256xf32>
    %38 = arith.addf %37, %36 : vector<1x256xf32>
    %c0_15 = arith.constant 0 : index
    %c0_16 = arith.constant 0 : index
    %39 = vector.load %arg5[%c0_15, %c0_16] : memref<1x256xf32, #tpu.memory_space<vmem>>, vector<1x256xf32>
    tpu.vector_store %arg5[%c0_15, %c0_16], %38 {strides = array<i32>} : memref<1x256xf32, #tpu.memory_space<vmem>>, vector<1x256xf32>,
    %c0_i32_17 = arith.constant 0 : i32
    %40 = arith.cmpi eq, %arg1, %c0_i32_17 : i32
    %41 = arith.extui %40 : i1 to i32
    %c0_i32_18 = arith.constant 0 : i32
    %42 = arith.cmpi ne, %41, %c0_i32_18 : i32
    scf.if %42 {
      %c0_19 = arith.constant 0 : index
      %c0_20 = arith.constant 0 : index
      %43 = vector.load %arg5[%c0_19, %c0_20] : memref<1x256xf32, #tpu.memory_space<vmem>>, vector<1x256xf32>
      %44 = vector.shape_cast %43 : vector<1x256xf32> to vector<1x1x256xf32>
      %cst_21 = arith.constant dense<0.000000e+00> : vector<1xf32>
      %45 = vector.multi_reduction <add>, %44, %cst_21 [1, 2] : vector<1x1x256xf32> to vector<1xf32>
      %46 = vector.shape_cast %45 : vector<1xf32> to vector<1x1x1xf32>
      %47 = vector.extract %46[0, 0, 0] : f32 from vector<1x1x1xf32>
      %48 = tpu.iota {dimensions = array<i32: 0>} : vector<8x128xi32>
      %49 = tpu.iota {dimensions = array<i32: 1>} : vector<8x128xi32>
      %c0_i32_22 = arith.constant 0 : i32
      %50 = vector.broadcast %c0_i32_22 : i32 to vector<8x128xi32>
      %51 = arith.cmpi eq, %48, %50 : vector<8x128xi32>
      %c0_i32_23 = arith.constant 0 : i32
      %52 = vector.broadcast %c0_i32_23 : i32 to vector<8x128xi32>
      %53 = arith.cmpi eq, %49, %52 : vector<8x128xi32>
      %54 = arith.andi %51, %53 : vector<8x128xi1>
      %cst_24 = arith.constant 0.000000e+00 : f32
      %55 = vector.broadcast %47 : f32 to vector<8x128xf32>
      %56 = vector.broadcast %cst_24 : f32 to vector<8x128xf32>
      %57 = arith.select %54, %55, %56 : vector<8x128xi1>, vector<8x128xf32>
      %c0_25 = arith.constant 0 : index
      %c0_26 = arith.constant 0 : index
      %c0_27 = arith.constant 0 : index
      %58 = vector.load %arg4[%c0_25, %c0_26, %c0_27] : memref<1x8x128xf32, #tpu.memory_space<vmem>>, vector<1x8x128xf32>
      %59 = vector.shape_cast %58 : vector<1x8x128xf32> to vector<8x128xf32>
      %60 = vector.shape_cast %57 : vector<8x128xf32> to vector<1x8x128xf32>
      tpu.vector_store %arg4[%c0_25, %c0_26, %c0_27], %60 {strides = array<i32>} : memref<1x8x128xf32, #tpu.memory_space<vmem>>, vector<1x8x128xf32>,
    } else {
    }
    return
  }
  func.func @transform_0(%arg0: i32, %arg1: i32) -> (i32, i32, i32) {
    %c0_i32 = arith.constant 0 : i32
    %c0_i32_0 = arith.constant 0 : i32
    return %arg0, %c0_i32, %arg1 : i32, i32, i32
  }
  func.func @transform_1(%arg0: i32, %arg1: i32) -> (i32, i32, i32) {
    %c0_i32 = arith.constant 0 : i32
    %c0_i32_0 = arith.constant 0 : i32
    return %arg0, %c0_i32, %arg1 : i32, i32, i32
  }
  func.func @transform_2(%arg0: i32, %arg1: i32) -> (i32, i32, i32) {
    %c0_i32 = arith.constant 0 : i32
    %c0_i32_0 = arith.constant 0 : i32
    %c0_i32_1 = arith.constant 0 : i32
    return %arg0, %c0_i32, %c0_i32_0 : i32, i32, i32
  }
}

</mosaic_0001>

<llo_original>
// kernel: tpu_custom_call.1
$region0: #{tpu_custom_call.1}
  #allocation0 [shape = 'u32[]', space=smem, size = 0x4, offset = 0x4, fixed_abs, tag = 'smem constant byte address 0x4 - core index']
  #allocation1 [shape = 'u32[72,128]{1,0:T(1,128)}', space=vmem, size = 0x9000, scoped, tag = 'internal scratch']
  #allocation2 [shape = 'f32[1,256]{1,0:T(1,128)}', space=vmem, size = 0x400, scoped, tag = 'scratch operand']
  %s0 = inlined_call_operand.hbm [shape: f32[2,4,256], index: 0, kind: input, shape index: {}]
  %s1 = inlined_call_operand.vmem [shape: s8[2,1,256], index: 1, kind: input, shape index: {}]
  %s2 = inlined_call_operand.hbm [shape: f32[2,8,128], index: 2, kind: output, shape index: {}]
  %s3 = sld [smem:[#allocation0]]
  $region53: #{tpu_custom_call.1} parent=0
    _
  %s5 = ssub.s32 1, %s3
  %s6 = scalar_select 0, %s5, %s3
  $region1: #{tpu_custom_call.1} parent=0
    #allocation3 [shape = 'u8[8192]{0}', space=vmem, size = 0x2000, scoped, tag = 'input window, operand 0']
    #allocation4 [shape = 's32[2]{0}', space=sflag, size = 0x8, scoped, tag = 'scoped memory for tpu_custom_call.1']
    #allocation5 [shape = 's32[2]{0}', space=sflag, size = 0x8, scoped, tag = 'scoped memory for tpu_custom_call.1']
    #allocation6 [shape = 'u8[8192]{0}', space=vmem, size = 0x2000, scoped, tag = 'output window, operand 0']
    %7 = vsyncpa [#allocation4], 0
    %s8 = scalar_lea.sflag [#allocation4], 1
    %9 = vsyncpa %s8, 0
    %10 = vsyncpa [#allocation5], 0
    %s11 = scalar_lea.sflag [#allocation5], 1
    %12 = vsyncpa %s11, 0
    loop: start=0, step=1, limit=4
    $region2: #{tpu_custom_call.1} parent=1 // loop_pre_header
      _
    $region3: #{tpu_custom_call.1} parent=1 // loop_header
      %s14 = sphi 0, %s18
      %p15 = scmp.ge.s32.totalorder %s14, 4
      %s21 = sphi 0, %s33
      %s22 = sphi 0, %s29
      %s23 = sphi 0, %s21
      %s24 = sphi 0, %s22
      %s25 = sphi 0, %s23
      %s26 = sphi 0, %s24
      %s38 = sphi 0, %s40
      %s41 = sphi 0, %s38
      %s42 = sphi 0, %s41
      %s58 = sphi 0, %s42
      %s66 = sphi 0, %s68
      %s69 = sphi 0, %s66
      %s70 = sphi 0, %s69
      %s86 = sphi 0, %s70
      %s92 = sphi 0, %s94
      %s95 = sphi 0, %s92
      %s96 = sphi 0, %s95
      %s112 = sphi 0, %s96
    $region4: #{tpu_custom_call.1} parent=1 // loop_header_branch
      %17 = sbr.rel (%p15) target = $region8
    $region5: #{tpu_custom_call.1} parent=1 // loop_body
      %s19 = ssub.s32 %s14, 1
      %s20 = ssub.s32 %s14, 2
      %s27 = sadd.s32 1, %s22
      %p28 = scmp.ge.s32.totalorder %s27, 1
      %s29 = scalar_select %p28, 0, %s27
      %s30 = sadd.s32 1, %s21
      %s31 = scalar_select %p28, %s30, %s21
      %p32 = scmp.ge.s32.totalorder %s31, 2
      %s33 = scalar_select %p32, 0, %s31
      %s34 = ssub.s32 %s21, %s33
      %s35 = ssub.s32 %s22, %s29
      %s36 = sor.u32 %s34, %s35
      %p37 = scmp.eq.s32.totalorder %s36, 0
      %s39 = sadd.s32 %s38, 1
      %s40 = scalar_select %p37, %s38, %s39
      %p43 = pneg %p37
      %p44 = scmp.eq.s32.totalorder %s14, 1
      %p45 = por %p43, %p44
      %p46 = scmp.ne.s32.totalorder %s38, %s41
      %p47 = scmp.eq.s32.totalorder %s14, 0
      %p48 = por %p46, %p47
      %p49 = scmp.ne.s32.totalorder %s38, %s41
      %p50 = scmp.eq.s32.totalorder %s19, 1
      %p51 = por %p49, %p50
      %p52 = scmp.ne.s32.totalorder %s41, %s42
      %p53 = scmp.eq.s32.totalorder %s19, 0
      %p54 = por %p52, %p53
      %p55 = scmp.ne.s32.totalorder %s41, %s42
      %p56 = scmp.eq.s32.totalorder %s20, 1
      %p57 = por %p55, %p56
      %p59 = scmp.ne.s32.totalorder %s42, %s58
      %p60 = scmp.eq.s32.totalorder %s20, 0
      %p61 = por %p59, %p60
      %s62 = ssub.s32 %s21, %s33
      %s63 = ssub.s32 %s22, %s29
      %s64 = sor.u32 %s62, %s63
      %p65 = scmp.eq.s32.totalorder %s64, 0
      %s67 = sadd.s32 %s66, 1
      %s68 = scalar_select %p65, %s66, %s67
      %p71 = pneg %p65
      %p72 = scmp.eq.s32.totalorder %s14, 1
      %p73 = por %p71, %p72
      %p74 = scmp.ne.s32.totalorder %s66, %s69
      %p75 = scmp.eq.s32.totalorder %s14, 0
      %p76 = por %p74, %p75
      %p77 = scmp.ne.s32.totalorder %s66, %s69
      %p78 = scmp.eq.s32.totalorder %s19, 1
      %p79 = por %p77, %p78
      %p80 = scmp.ne.s32.totalorder %s69, %s70
      %p81 = scmp.eq.s32.totalorder %s19, 0
      %p82 = por %p80, %p81
      %p83 = scmp.ne.s32.totalorder %s69, %s70
      %p84 = scmp.eq.s32.totalorder %s20, 1
      %p85 = por %p83, %p84
      %p87 = scmp.ne.s32.totalorder %s70, %s86
      %p88 = scmp.eq.s32.totalorder %s20, 0
      %p89 = por %p87, %p88
      %s90 = ssub.s32 %s21, %s33
      %p91 = scmp.eq.s32.totalorder %s90, 0
      %s93 = sadd.s32 %s92, 1
      %s94 = scalar_select %p91, %s92, %s93
      %p97 = pneg %p91
      %p98 = scmp.eq.s32.totalorder %s14, 1
      %p99 = por %p97, %p98
      %p100 = scmp.ne.s32.totalorder %s92, %s95
      %p101 = scmp.eq.s32.totalorder %s14, 0
      %p102 = por %p100, %p101
      %p103 = scmp.ne.s32.totalorder %s92, %s95
      %p104 = scmp.eq.s32.totalorder %s19, 1
      %p105 = por %p103, %p104
      %p106 = scmp.ne.s32.totalorder %s95, %s96
      %p107 = scmp.eq.s32.totalorder %s19, 0
      %p108 = por %p106, %p107
      %p109 = scmp.ne.s32.totalorder %s95, %s96
      %p110 = scmp.eq.s32.totalorder %s20, 1
      %p111 = por %p109, %p110
      %p113 = scmp.ne.s32.totalorder %s96, %s112
      %p114 = scmp.eq.s32.totalorder %s20, 0
      %p115 = por %p113, %p114
      %p116 = scmp.le.s32.totalorder 1, %s14
      %p117 = scmp.lt.s32.totalorder %s14, 3
      %p118 = pnand %p116, %p117
      %p119 = pneg %p118
      // Predicated region
      $region9: #{tpu_custom_call.1} parent=5 // pred_check
        _
      $region10: #{tpu_custom_call.1} parent=5 // pred_check_branch
        %121 = sbr.rel (%p118) target = $region12
      $region11: #{tpu_custom_call.1} parent=5 // pred_region
        %s122 = ssub.s32 %s14, 1
      $region12: #{tpu_custom_call.1} parent=5 // pred_fallthru
        _
      %p123 = scmp.lt.s32.totalorder %s14, 2
      // Predicated region
      $region13: #{tpu_custom_call.1} parent=5 // pred_check
        %p124 = pneg %p123
      $region14: #{tpu_custom_call.1} parent=5 // pred_check_branch
        %126 = sbr.rel (%p124) target = $region16
      $region15: #{tpu_custom_call.1} parent=5 // pred_region
        // Predicated region
        $region17: #{tpu_custom_call.1} parent=15 // pred_check
          %p127 = pneg %p48
        $region18: #{tpu_custom_call.1} parent=15 // pred_check_branch
          %129 = sbr.rel (%p127) target = $region20
        $region19: #{tpu_custom_call.1} parent=15 // pred_region
          %s130 = sand.u32 %s38, 1
          %s131 = scalar_lea.sflag [#allocation4], %s130
          %s132 = sand.u32 %s38, 1
          %s133 = smul.addr %s132, 8
          %s134 = scalar_lea.vmem [#allocation3], %s133
          %s135 = smul.u32 2, %s22
          %137 = vsyncadd %s131, 0
          %s138 = smul.addr %s21, 2
          %s139 = sadd.s32 %s135, %s138
          %s140 = smul.addr %s139, 4
          %s141 = scalar_lea.hbm %s0, %s140
          %s143 = sshll.u32 %s141, 4
          %s144 = int_to_ptr.hbm [resolvable:$true] %s143
          %s145 = sshll.u32 %s134, 4
          %s146 = int_to_ptr.vmem [resolvable:$true] %s145
          %148 = dma.hbm_to_vmem [thread:$0]  %s144, 128, %s146, %s131
        $region20: #{tpu_custom_call.1} parent=15 // pred_fallthru
          _
        // Predicated region
        $region21: #{tpu_custom_call.1} parent=15 // pred_check
          %p149 = pneg %p76
        $region22: #{tpu_custom_call.1} parent=15 // pred_check_branch
          %151 = sbr.rel (%p149) target = $region24
        $region23: #{tpu_custom_call.1} parent=15 // pred_region
          %s152 = smul.u32 2, %s22
          %p153 = scmp.lt.s32.totalorder %s21, 1
          %s154 = scalar_select %p153, %s21, 1
          %p155 = scmp.lt.s32.totalorder %s152, 1
          %s156 = scalar_select %p155, %s152, 1
          %s157 = smul.addr %s154, 2
          %s158 = sadd.s32 %s156, %s157
          %s159 = scalar_lea.vmem %s1, %s158
          %s160 = smul.u32 2, %s22
        $region24: #{tpu_custom_call.1} parent=15 // pred_fallthru
          _
      $region16: #{tpu_custom_call.1} parent=5 // pred_fallthru
        _
      %p161 = scmp.le.s32.totalorder 1, %s14
      %p162 = scmp.lt.s32.totalorder %s14, 3
      %p163 = pnand %p161, %p162
      %p164 = pneg %p163
      // Predicated region
      $region25: #{tpu_custom_call.1} parent=5 // pred_check
        _
      $region26: #{tpu_custom_call.1} parent=5 // pred_check_branch
        %166 = sbr.rel (%p163) target = $region28
      $region27: #{tpu_custom_call.1} parent=5 // pred_region
        %s167 = ssub.s32 %s14, 1
        %s168 = sand.u32 %s41, 1
        %s169 = scalar_lea.sflag [#allocation4], %s168
        %s170 = sand.u32 %s41, 1
        %s171 = smul.addr %s170, 8
        %s172 = scalar_lea.vmem [#allocation3], %s171
        // Predicated region
        $region29: #{tpu_custom_call.1} parent=27 // pred_check
          %p173 = pneg %p54
        $region30: #{tpu_custom_call.1} parent=27 // pred_check_branch
          %175 = sbr.rel (%p173) target = $region32
        $region31: #{tpu_custom_call.1} parent=27 // pred_region
          %177 = dma.done %s169, 128
        $region32: #{tpu_custom_call.1} parent=27 // pred_fallthru
          _
        %s178 = sand.u32 %s41, 1
        %s179 = scalar_lea.sflag [#allocation4], %s178
        %s180 = sand.u32 %s41, 1
        %s181 = smul.addr %s180, 8
        %s182 = scalar_lea.vmem [#allocation3], %s181
        %p183 = pneg %p54
        %p184 = pneg %p51
        %s185 = smul.u32 2, %s24
        %p186 = scmp.lt.s32.totalorder %s23, 1
        %s187 = scalar_select %p186, %s23, 1
        %p188 = scmp.lt.s32.totalorder %s185, 1
        %s189 = scalar_select %p188, %s185, 1
        %s190 = smul.addr %s187, 2
        %s191 = sadd.s32 %s189, %s190
        %s192 = scalar_lea.vmem %s1, %s191
        %p193 = pneg %p82
        %p194 = pneg %p79
        %p195 = pneg %p108
        %p196 = pneg %p105
        %s197 = sand.u32 %s95, 1
        %s198 = scalar_lea.sflag [#allocation5], %s197
        %s199 = sand.u32 %s95, 1
        %s200 = smul.addr %s199, 8
        %s201 = scalar_lea.vmem [#allocation6], %s200
        %s202 = smul.u32 2, %s24
        %s203 = smul.u32 2, %s24
        %p204 = scmp.lt.s32.totalorder %s23, 1
        %s205 = scalar_select %p204, %s23, 1
        %p206 = scmp.lt.s32.totalorder %s203, 1
        %s207 = scalar_select %p206, %s203, 1
        %s208 = smul.addr %s205, 2
        %s209 = sadd.s32 %s207, %s208
        %s210 = scalar_lea.vmem %s1, %s209
        %s211 = smul.u32 2, %s24
        %p212 = scmp.eq.s32.totalorder %s24, 0
        // Predicated region
        $region33: #{tpu_custom_call.1} parent=27 // pred_check
          %p213 = pneg %p212
        $region34: #{tpu_custom_call.1} parent=27 // pred_check_branch
          %215 = sbr.rel (%p213) target = $region36
        $region35: #{tpu_custom_call.1} parent=27 // pred_region
          %v216 = vlaneseq
          %vm217 = vcmp.ge.s32.totalorder %v216, 0
          %vm218 = vcmp.lt.s32.totalorder %v216, 256
          %vm219 = vmand %vm217, %vm218
          %220 = vst.msk [vmem:[#allocation2] sm:$0x3] %vm219, 0.0
        $region36: #{tpu_custom_call.1} parent=27 // pred_fallthru
          _
        %v221 = vld [vmem:[%s172] sm:$0xff]
        %v222 = vld [vmem:[%s210] sm:$0x3]
        %v223 = vunpack.c.0.s8 %v222
        %225 = vst [vmem:[#allocation1] ss:$2 sm:$0xff] %v221
        %v226 = vld.sshfl [vmem:[#allocation1] sm:$0xff pattern:$0x75316420]
        %v227 = vld.sshfl [vmem:[#allocation1 + $0x8] sm:$0xff pattern:$0x75316420]
        %vm230 = vcmask 1043456
        %v231 = vsel %vm230, %v226, -inf
        %v232 = vrot.slane %v231, 4
        %v233 = vmax.f32 %v231, %v232
        %v234 = vrot.slane %v233, 2
        %v235 = vmax.f32 %v233, %v234
        %v236 = vrot.slane %v235, 1
        %v237 = vmax.f32 %v235, %v236
        %v238 = vsel %vm230, %v227, -inf
        %v239 = vrot.slane %v238, 4
        %v240 = vmax.f32 %v238, %v239
        %v241 = vrot.slane %v240, 2
        %v242 = vmax.f32 %v240, %v241
        %v243 = vrot.slane %v242, 1
        %v244 = vmax.f32 %v242, %v243
        %v247 = vrot.slane %v244, 4
        %v248 = vsel %vm230, %v237, %v247
        %v250 = vsub.f32 %v221, %v248
        %v251 = vmul.f32 %v250, 1.442695
        %v252 = vpow.pop %v251
        %v253 = vlaneseq
        %v254 = vshrl.u32 %v253, 7
        %v255 = vperm.slane %v223, 0
        %v256 = vperm.slane %v223, 4
        %v257 = vperm.slane %v255, 0
        %v258 = vperm.slane %v256, 0
        %vm259 = vcmp.eq.s32.totalorder %v254, %v257
        %vm260 = vcmp.eq.s32.totalorder %v254, %v258
        %261 = vst [vmem:[#allocation1] ss:$2 sm:$0xff] %v221
        %v262 = vld.sshfl [vmem:[#allocation1] sm:$0xff pattern:$0x75316420]
        %v263 = vld.sshfl [vmem:[#allocation1 + $0x8] sm:$0xff pattern:$0x75316420]
        %v266 = vsel %vm259, %v262, 0.0
        %v267 = vsel %vm260, %v263, 0.0
        %v268 = vsel %vm230, %v266, 0.0
        %v269 = vrot.slane %v268, 4
        %v270 = vadd.f32 %v268, %v269
        %v271 = vrot.slane %v270, 2
        %v272 = vadd.f32 %v270, %v271
        %v273 = vrot.slane %v272, 1
        %v274 = vadd.f32 %v272, %v273
        %v275 = vsel %vm230, %v267, 0.0
        %v276 = vrot.slane %v275, 4
        %v277 = vadd.f32 %v275, %v276
        %v278 = vrot.slane %v277, 2
        %v279 = vadd.f32 %v277, %v278
        %v280 = vrot.slane %v279, 1
        %v281 = vadd.f32 %v279, %v280
        %283 = vst [vmem:[#allocation1] ss:$2 sm:$0xff] %v252
        %v284 = vld.sshfl [vmem:[#allocation1] sm:$0xff pattern:$0x75316420]
        %v285 = vld.sshfl [vmem:[#allocation1 + $0x8] sm:$0xff pattern:$0x75316420]
        %v288 = vsel %vm259, %v284, 0.0
        %v289 = vsel %vm260, %v285, 0.0
        %v290 = vsel %vm230, %v288, 0.0
        %v291 = vrot.slane %v290, 4
        %v292 = vadd.f32 %v290, %v291
        %v293 = vrot.slane %v292, 2
        %v294 = vadd.f32 %v292, %v293
        %v295 = vrot.slane %v294, 1
        %v296 = vadd.f32 %v294, %v295
        %v297 = vsel %vm230, %v289, 0.0
        %v298 = vrot.slane %v297, 4
        %v299 = vadd.f32 %v297, %v298
        %v300 = vrot.slane %v299, 2
        %v301 = vadd.f32 %v299, %v300
        %v302 = vrot.slane %v301, 1
        %v303 = vadd.f32 %v301, %v302
        %304 = vst [vmem:[#allocation1] ss:$2 sm:$0xff] %v252
        %v305 = vld.sshfl [vmem:[#allocation1] sm:$0xff pattern:$0x75316420]
        %v306 = vld.sshfl [vmem:[#allocation1 + $0x8] sm:$0xff pattern:$0x75316420]
        %v309 = vsel %vm259, 0.0, %v305
        %v310 = vsel %vm260, 0.0, %v306
        %v311 = vsel %vm230, %v309, 0.0
        %v312 = vrot.slane %v311, 4
        %v313 = vadd.f32 %v311, %v312
        %v314 = vrot.slane %v313, 2
        %v315 = vadd.f32 %v313, %v314
        %v316 = vrot.slane %v315, 1
        %v317 = vadd.f32 %v315, %v316
        %v318 = vsel %vm230, %v310, 0.0
        %v319 = vrot.slane %v318, 4
        %v320 = vadd.f32 %v318, %v319
        %v321 = vrot.slane %v320, 2
        %v322 = vadd.f32 %v320, %v321
        %v323 = vrot.slane %v322, 1
        %v324 = vadd.f32 %v322, %v323
        %v325 = vadd.f32 %v296, %v317
        %v326 = vadd.f32 %v303, %v324
        %v327 = vsub.f32 %v274, %v237
        %v328 = vsub.f32 %v281, %v244
        %v329 = vlog2.pop %v325
        %v330 = vmul.f32 %v329, 0.6931472
        %v331 = vlog2.pop %v326
        %v332 = vmul.f32 %v331, 0.6931472
        %v333 = vsub.f32 %v327, %v330
        %v334 = vsub.f32 %v328, %v332
        %v335 = vrcp.pop %v325
        %v336 = vmul.f32 %v325, %v335
        %v337 = vsub.f32 1.0, %v336
        %v338 = vmul.f32 %v335, %v337
        %v339 = vadd.f32 %v335, %v338
        %vm340 = vweird.f32 %v325
        %vm341 = vweird.f32 %v335
        %vm342 = vmor %vm340, %vm341
        %v343 = vsel %vm342, %v335, %v339
        %v344 = vand.u32 2147483647, %v325
        %vm345 = vcmp.eq.f32.partialorder %v344, 8.507059e+37
        %v346 = vand.u32 %v325, 2147483648
        %v347 = vor.u32 1.1754944e-38, %v346
        %v348 = vsel %vm345, %v347, %v343
        %v349 = vmul.f32 %v317, %v348
        %v350 = vrcp.pop %v326
        %v351 = vmul.f32 %v326, %v350
        %v352 = vsub.f32 1.0, %v351
        %v353 = vmul.f32 %v350, %v352
        %v354 = vadd.f32 %v350, %v353
        %vm355 = vweird.f32 %v326
        %vm356 = vweird.f32 %v350
        %vm357 = vmor %vm355, %vm356
        %v358 = vsel %vm357, %v350, %v354
        %v359 = vand.u32 2147483647, %v326
        %vm360 = vcmp.eq.f32.partialorder %v359, 8.507059e+37
        %v361 = vand.u32 %v326, 2147483648
        %v362 = vor.u32 1.1754944e-38, %v361
        %v363 = vsel %vm360, %v362, %v358
        %v364 = vmul.f32 %v324, %v363
        %v365 = vmul.f32 %v349, %v349
        %v366 = vmul.f32 %v364, %v364
        %v367 = vsub.f32 0.0, %v365
        %v368 = vsub.f32 0.0, %v366
        %v369 = vmul.f32 %v367, %v333
        %v370 = vmul.f32 %v368, %v334
        %v371 = vld [vmem:[#allocation2] sm:$0x3]
        %v374 = vrot.slane %v370, 7
        %vm375 = vcmask 1040384
        %v376 = vsel %vm375, %v369, %v374
        %v378 = vadd.f32 %v371, %v376
        %v379 = vlaneseq
        %vm380 = vcmp.ge.s32.totalorder %v379, 0
        %vm381 = vcmp.lt.s32.totalorder %v379, 256
        %vm382 = vmand %vm380, %vm381
        %383 = vst.msk [vmem:[#allocation2] sm:$0x3] %vm382, %v378
        // Predicated region
        $region37: #{tpu_custom_call.1} parent=27 // pred_check
          %p384 = pneg %p212
        $region38: #{tpu_custom_call.1} parent=27 // pred_check_branch
          %386 = sbr.rel (%p384) target = $region40
        $region39: #{tpu_custom_call.1} parent=27 // pred_region
          %v387 = vld [vmem:[#allocation2] sm:$0x3]
          %v389 = vperm.slane %v387, 0
          %v390 = vperm.slane %v387, 1
          %v393 = vsel %vm375, %v389, 0.0
          %v394 = vsel %vm375, %v390, 0.0
          %v395 = vadd.f32 %v393, %v394
          %396 = vadd.xlane.f32.xlu0 %v395
          %v397 = vpop.xlane.xlu0 %396
          %v398 = vrot.slane %v397, 4
          %v399 = vadd.f32 %v397, %v398
          %v400 = vrot.slane %v399, 2
          %v401 = vadd.f32 %v399, %v400
          %v402 = vrot.slane %v401, 1
          %v403 = vadd.f32 %v401, %v402
          %s404 = vtos %v403
          %v405 = vlaneseq
          %v406 = vand.u32 %v405, 127
          %vm407 = vcmp.eq.s32.totalorder %v254, 0
          %vm408 = vcmp.eq.s32.totalorder %v406, 0
          %vm409 = vmand %vm407, %vm408
          %v410 = vstv %s404
          %v411 = vsel %vm409, %v410, 0.0
          %412 = vst [vmem:[%s201] sm:$0xff] %v411
        $region40: #{tpu_custom_call.1} parent=27 // pred_fallthru
          _
        %s413 = sand.u32 %s95, 1
        %s414 = scalar_lea.sflag [#allocation5], %s413
        %s415 = sand.u32 %s95, 1
        %s416 = smul.addr %s415, 8
        %s417 = scalar_lea.vmem [#allocation6], %s416
        // Predicated region
        $region41: #{tpu_custom_call.1} parent=27 // pred_check
          %p418 = pneg %p105
        $region42: #{tpu_custom_call.1} parent=27 // pred_check_branch
          %420 = sbr.rel (%p418) target = $region44
        $region43: #{tpu_custom_call.1} parent=27 // pred_region
          %422 = vsyncadd %s414, 0
          %s423 = smul.addr %s23, 8
          %s424 = scalar_lea.hbm %s2, %s423
          %s426 = sshll.u32 %s417, 4
          %s427 = int_to_ptr.vmem [resolvable:$true] %s426
          %s428 = sshll.u32 %s424, 4
          %s429 = int_to_ptr.hbm [resolvable:$true] %s428
          %431 = dma.vmem_to_hbm [thread:$0]  %s427, 128, %s429, %s414
        $region44: #{tpu_custom_call.1} parent=27 // pred_fallthru
          _
      $region28: #{tpu_custom_call.1} parent=5 // pred_fallthru
        _
      %p432 = scmp.le.s32.totalorder 2, %s14
      // Predicated region
      $region45: #{tpu_custom_call.1} parent=5 // pred_check
        %p433 = pneg %p432
      $region46: #{tpu_custom_call.1} parent=5 // pred_check_branch
        %435 = sbr.rel (%p433) target = $region48
      $region47: #{tpu_custom_call.1} parent=5 // pred_region
        %s436 = ssub.s32 %s14, 2
        // Predicated region
        $region49: #{tpu_custom_call.1} parent=47 // pred_check
          %p437 = pneg %p111
        $region50: #{tpu_custom_call.1} parent=47 // pred_check_branch
          %439 = sbr.rel (%p437) target = $region52
        $region51: #{tpu_custom_call.1} parent=47 // pred_region
          %s440 = sand.u32 %s96, 1
          %s441 = scalar_lea.sflag [#allocation5], %s440
          %s442 = sand.u32 %s96, 1
          %s443 = smul.addr %s442, 8
          %s444 = scalar_lea.vmem [#allocation6], %s443
          %446 = dma.done %s441, 128
        $region52: #{tpu_custom_call.1} parent=47 // pred_fallthru
          _
      $region48: #{tpu_custom_call.1} parent=5 // pred_fallthru
        _
    $region6: #{tpu_custom_call.1} parent=1 // loop_footer
      %s18 = sadd.s32 1, %s14
    $region7: #{tpu_custom_call.1} parent=1 // loop_footer_branch
      %13 = sbr.rel target = $region3
    $region8: #{tpu_custom_call.1} parent=1 // loop_exit
      _
    %447 = vsyncpa [#allocation4], 1
    %s448 = scalar_lea.sflag [#allocation4], 1
    %449 = vsyncpa %s448, 1
    %450 = vsyncpa [#allocation5], 1
    %s451 = scalar_lea.sflag [#allocation5], 1
    %452 = vsyncpa %s451, 1

</llo_original>
